<compile_context>
chip_gen: v7x
topology: tpu7x:2x2x1
jax: 0.10.0
libtpu: 0.0.40
codegen_flags: <defaults>
</compile_context>

<pallas_src>
import functools

import jax
import jax.numpy as jnp
from jax.experimental import pallas as pl
from jax.experimental.pallas import tpu as pltpu


EMBEDDING_DIM = 32   # nn.Embedding dim
BERT_HIDDEN = 64     # stand-in for bert_model.config.hidden_size
FC1_OUT = 128        # nn.Linear(embedding_dim + hidden, 128)


# ----------------------------- Pallas kernel --------------------------------
def _rec_mlp_kernel(u_ref, p_ref, w1t_ref, b1_ref, w2_ref, b2_ref, o_ref):
    """fc2(relu(fc1(cat(user_emb, product_features)))) for one batch tile.

    All tensors are transposed (feature-major, batch on lanes):
      u_ref  : [E, tb]    bf16  user embeddings
      p_ref  : [H, tb]    bf16  BERT CLS features
      w1t_ref: [128, E+H] bf16  fc1 weight (torch [out, in] layout)
      b1_ref : [128, 1]   f32
      w2_ref : [128, 1]   f32   fc2 weight as a column
      b2_ref : [1, 1]     f32   fc2 bias (SMEM scalar)
      o_ref  : [1, tb]    f32   scores, lane-dense
    """
    # torch.cat((user_emb, product_features), dim=1) -> transposed: axis 0.
    # E=32 is a multiple of 8 sublanes, so this is a tile-aligned VMEM copy.
    x_t = jnp.concatenate([u_ref[...], p_ref[...]], axis=0)             # [E+H, tb]
    # fc1: h^T = W1 @ x^T, single MXU matmul, f32 accumulation.
    h = jnp.dot(w1t_ref[...], x_t, preferred_element_type=jnp.float32)  # [128, tb]
    h = jnp.maximum(h + b1_ref[...], 0.0)                               # bias + ReLU
    # fc2 (out_features=1): VPU multiply + sublane (XLU) reduce; lane-major out.
    s = jnp.sum(h * w2_ref[...], axis=0, keepdims=True)                 # [1, tb]
    o_ref[...] = (s + b2_ref[0, 0]).astype(o_ref.dtype)


def _mlp_pallas(u_t, p_t, w1t, b1, w2, b2, *, tile_b):
    e, bp = u_t.shape
    h_feat = p_t.shape[0]
    n_tiles = bp // tile_b

    grid_spec = pltpu.PrefetchScalarGridSpec(
        num_scalar_prefetch=0,
        grid=(n_tiles,),
        in_specs=[
            # Activations: tiled along the (lane-major) batch axis.
            pl.BlockSpec((e, tile_b), lambda i: (0, i)),
            pl.BlockSpec((h_feat, tile_b), lambda i: (0, i)),
            # Weights / biases: resident in VMEM across all grid steps.
            pl.BlockSpec((FC1_OUT, e + h_feat), lambda i: (0, 0)),
            pl.BlockSpec((FC1_OUT, 1), lambda i: (0, 0)),
            pl.BlockSpec((FC1_OUT, 1), lambda i: (0, 0)),
            # fc2 bias: single scalar, keep it in SMEM.
            pl.BlockSpec(memory_space=pltpu.MemorySpace.SMEM),
        ],
        out_specs=pl.BlockSpec((1, tile_b), lambda i: (0, i)),
    )
    return pl.pallas_call(
        _rec_mlp_kernel,
        out_shape=jax.ShapeDtypeStruct((1, bp), jnp.float32),
        grid_spec=grid_spec,
        compiler_params=pltpu.CompilerParams(
            # Batch tiles are independent -> shard across TCs on v7x; on
            # v5e/v6e this is just the pipelined serial loop.
            dimension_semantics=("parallel",),
        ),
    )(u_t, p_t, w1t, b1, w2, b2)


# ------------------------------ Model wrapper --------------------------------
def init_params(num_users, num_products, embedding_dim, bert_hidden, key):
    ks = jax.random.split(key, 6)
    scale = 0.02
    return {
        # Embedding tables (torch nn.Embedding layout: [vocab, dim]).
        "user_emb_table": jax.random.normal(
            ks[0], (num_users, embedding_dim), jnp.float32),
        "prod_emb_table": jax.random.normal(
            ks[1], (num_products, embedding_dim), jnp.float32),
        # fc1: Linear(embedding_dim + bert_hidden, 128) in torch [out, in]
        # layout, in-feature order = [user_emb | product_features]; bf16 for MXU.
        "w1_t": (scale * jax.random.normal(
            ks[2], (FC1_OUT, embedding_dim + bert_hidden),
            jnp.float32)).astype(jnp.bfloat16),
        "b1": scale * jax.random.normal(ks[3], (FC1_OUT, 1), jnp.float32),
        # fc2: Linear(128, 1) stored as a [128, 1] column; bias as [1, 1].
        "w2": scale * jax.random.normal(ks[4], (FC1_OUT, 1), jnp.float32),
        "b2": scale * jax.random.normal(ks[5], (1, 1), jnp.float32),
    }


@functools.partial(jax.jit, static_argnames=("tile_b",))
def recommendation_forward(params, user_ids, product_ids, product_cls_features,
                           *, tile_b=128):
    # The torch forward computes product_embeddings(product_ids) but never uses
    # it for the output -> dead code, skipped entirely.
    del product_ids

    # Embedding lookup (XLA gather, fused under jit), then flip to
    # feature-major layout so the batch axis maps to TPU lanes in the kernel.
    user_emb = jnp.take(params["user_emb_table"], user_ids, axis=0)   # [B, E]
    u_t = user_emb.T.astype(jnp.bfloat16)                             # [E, B]
    # TODO(synk): the full `bert_model(**product_titles)` transformer forward
    # is not translated; its CLS output (last_hidden_state[:, 0, :]) is taken
    # here as `product_cls_features`.
    p_t = product_cls_features.T.astype(jnp.bfloat16)                 # [H, B]

    b = user_ids.shape[0]
    bp = pl.cdiv(b, tile_b) * tile_b
    if bp != b:  # pad batch up to a whole number of lane-tiles
        u_t = jnp.pad(u_t, ((0, 0), (0, bp - b)))
        p_t = jnp.pad(p_t, ((0, 0), (0, bp - b)))

    scores = _mlp_pallas(u_t, p_t, params["w1_t"], params["b1"],
                         params["w2"], params["b2"], tile_b=tile_b)   # [1, Bp]
    return scores[0, :b].reshape(b, 1)


# Pure-JAX reference (mirrors the torch module, same bf16 matmul inputs).
def _reference_forward(params, user_ids, product_ids, product_cls_features):
    del product_ids
    user_emb = jnp.take(params["user_emb_table"], user_ids, axis=0)
    combined = jnp.concatenate([user_emb, product_cls_features], axis=1)
    h = jnp.dot(combined.astype(jnp.bfloat16), params["w1_t"].T,
                preferred_element_type=jnp.float32)
    h = jnp.maximum(h + params["b1"][:, 0][None, :], 0.0)
    out = jnp.dot(h, params["w2"], precision=jax.lax.Precision.HIGHEST)
    return out + params["b2"]


# ---------------------------------- main -------------------------------------
if __name__ == "__main__":
    num_users, num_products = 100, 200
    batch = 8          # small demo batch; padded up to one 128-lane tile
    tile_b = 128

    key = jax.random.PRNGKey(0)
    k_params, k_u, k_p, k_feat = jax.random.split(key, 4)

    params = init_params(num_users, num_products, EMBEDDING_DIM, BERT_HIDDEN,
                         k_params)

    user_ids = jax.random.randint(k_u, (batch,), 0, num_users, jnp.int32)
    product_ids = jax.random.randint(k_p, (batch,), 0, num_products, jnp.int32)
    product_cls_features = jax.random.normal(
        k_feat, (batch, BERT_HIDDEN), jnp.float32)

    out = recommendation_forward(params, user_ids, product_ids,
                                 product_cls_features, tile_b=tile_b)
    out = jax.block_until_ready(out)

    ref = _reference_forward(params, user_ids, product_ids,
                             product_cls_features)
    assert out.shape == (batch, 1), out.shape
    assert jnp.allclose(out, ref, atol=2e-3, rtol=2e-2), (
        float(jnp.max(jnp.abs(out - ref))))

    print("KERNEL_OK")
</pallas_src>

<mosaic_0001>
module attributes {stable_mosaic.version = 11 : i64} {
  func.func @_rec_mlp_kernel(%arg0: i32, %arg1: memref<32x128xbf16, #tpu.memory_space<vmem>>, %arg2: memref<64x128xbf16, #tpu.memory_space<vmem>>, %arg3: memref<128x96xbf16, #tpu.memory_space<vmem>>, %arg4: memref<128x1xf32, #tpu.memory_space<vmem>>, %arg5: memref<128x1xf32, #tpu.memory_space<vmem>>, %arg6: memref<1x1xf32, #tpu.memory_space<smem>>, %arg7: memref<1x128xf32, #tpu.memory_space<vmem>>) attributes {dimension_semantics = [#tpu.dimension_semantics<parallel>], iteration_bounds = array<i64: 1>, scalar_prefetch = 0 : i64, scratch_operands = 0 : i64, tpu.core_type = #tpu.core_type<tc>, window_params = [{transform_indices = @transform_0, window_bounds = array<i64: 32, 128>}, {transform_indices = @transform_1, window_bounds = array<i64: 64, 128>}, {pipeline_mode = #tpu.pipeline_mode<synchronous>, transform_indices = @transform_2, window_bounds = array<i64: 128, 96>}, {pipeline_mode = #tpu.pipeline_mode<synchronous>, transform_indices = @transform_3, window_bounds = array<i64: 128, 1>}, {pipeline_mode = #tpu.pipeline_mode<synchronous>, transform_indices = @transform_4, window_bounds = array<i64: 128, 1>}, {transform_indices = @transform_5, window_bounds = array<i64: 1, 1>}, {transform_indices = @transform_6, window_bounds = array<i64: 1, 128>}]} {
    %c0 = arith.constant 0 : index
    %c0_0 = arith.constant 0 : index
    %0 = vector.load %arg1[%c0, %c0_0] : memref<32x128xbf16, #tpu.memory_space<vmem>>, vector<32x128xbf16>
    %c0_1 = arith.constant 0 : index
    %c0_2 = arith.constant 0 : index
    %1 = vector.load %arg2[%c0_1, %c0_2] : memref<64x128xbf16, #tpu.memory_space<vmem>>, vector<64x128xbf16>
    %2 = tpu.concatenate %0, %1 in 0 : vector<32x128xbf16>, vector<64x128xbf16> -> vector<96x128xbf16>
    %c0_3 = arith.constant 0 : index
    %c0_4 = arith.constant 0 : index
    %3 = vector.load %arg3[%c0_3, %c0_4] : memref<128x96xbf16, #tpu.memory_space<vmem>>, vector<128x96xbf16>
    %cst = arith.constant dense<0.000000e+00> : vector<128x128xf32>
    %4 = tpu.matmul %3, %2, %cst {dimension_numbers = #tpu.dot_dimension_numbers<[1], [0], [0], [1], [0, 0, 1, 1], [], []>} : vector<128x96xbf16>, vector<96x128xbf16>, vector<128x128xf32> -> vector<128x128xf32>
    %c0_5 = arith.constant 0 : index
    %c0_6 = arith.constant 0 : index
    %5 = vector.load %arg4[%c0_5, %c0_6] : memref<128x1xf32, #tpu.memory_space<vmem>>, vector<128x1xf32>
    %6 = vector.broadcast %5 : vector<128x1xf32> to vector<128x128xf32>
    %7 = arith.addf %4, %6 : vector<128x128xf32>
    %cst_7 = arith.constant 0.000000e+00 : f32
    %8 = vector.broadcast %cst_7 : f32 to vector<128x128xf32>
    %9 = arith.maximumf %7, %8 : vector<128x128xf32>
    %c0_8 = arith.constant 0 : index
    %c0_9 = arith.constant 0 : index
    %10 = vector.load %arg5[%c0_8, %c0_9] : memref<128x1xf32, #tpu.memory_space<vmem>>, vector<128x1xf32>
    %11 = vector.broadcast %10 : vector<128x1xf32> to vector<128x128xf32>
    %12 = arith.mulf %9, %11 : vector<128x128xf32>
    %cst_10 = arith.constant dense<0.000000e+00> : vector<128xf32>
    %13 = vector.multi_reduction <add>, %12, %cst_10 [0] : vector<128x128xf32> to vector<128xf32>
    %14 = vector.shape_cast %13 : vector<128xf32> to vector<1x128xf32>
    %c0_11 = arith.constant 0 : index
    %c0_12 = arith.constant 0 : index
    %15 = memref.load %arg6[%c0_11, %c0_12] : memref<1x1xf32, #tpu.memory_space<smem>>
    %16 = vector.broadcast %15 : f32 to vector<1x128xf32>
    %17 = arith.addf %14, %16 : vector<1x128xf32>
    %c0_13 = arith.constant 0 : index
    %c0_14 = arith.constant 0 : index
    %18 = vector.load %arg7[%c0_13, %c0_14] : memref<1x128xf32, #tpu.memory_space<vmem>>, vector<1x128xf32>
    tpu.vector_store %arg7[%c0_13, %c0_14], %17 {strides = array<i32>} : memref<1x128xf32, #tpu.memory_space<vmem>>, vector<1x128xf32>,
    return
  }
  func.func @transform_0(%arg0: i32) -> (i32, i32) {
    %c0_i32 = arith.constant 0 : i32
    %c0_i32_0 = arith.constant 0 : i32
    return %c0_i32, %arg0 : i32, i32
  }
  func.func @transform_1(%arg0: i32) -> (i32, i32) {
    %c0_i32 = arith.constant 0 : i32
    %c0_i32_0 = arith.constant 0 : i32
    return %c0_i32, %arg0 : i32, i32
  }
  func.func @transform_2(%arg0: i32) -> (i32, i32) {
    %c0_i32 = arith.constant 0 : i32
    %c0_i32_0 = arith.constant 0 : i32
    %c0_i32_1 = arith.constant 0 : i32
    return %c0_i32, %c0_i32_0 : i32, i32
  }
  func.func @transform_3(%arg0: i32) -> (i32, i32) {
    %c0_i32 = arith.constant 0 : i32
    %c0_i32_0 = arith.constant 0 : i32
    %c0_i32_1 = arith.constant 0 : i32
    return %c0_i32, %c0_i32_0 : i32, i32
  }
  func.func @transform_4(%arg0: i32) -> (i32, i32) {
    %c0_i32 = arith.constant 0 : i32
    %c0_i32_0 = arith.constant 0 : i32
    %c0_i32_1 = arith.constant 0 : i32
    return %c0_i32, %c0_i32_0 : i32, i32
  }
  func.func @transform_5(%arg0: i32) -> (i32, i32) {
    %c0_i32 = arith.constant 0 : i32
    %c0_i32_0 = arith.constant 0 : i32
    %c0_i32_1 = arith.constant 0 : i32
    return %c0_i32, %c0_i32_0 : i32, i32
  }
  func.func @transform_6(%arg0: i32) -> (i32, i32) {
    %c0_i32 = arith.constant 0 : i32
    %c0_i32_0 = arith.constant 0 : i32
    return %c0_i32, %arg0 : i32, i32
  }
}

</mosaic_0001>

<llo_original>
// kernel: recommendation_forward.1
$region0: #{recommendation_forward.1}
  #allocation0 [shape = 'u32[]', space=smem, size = 0x4, offset = 0x4, fixed_abs, tag = 'smem constant byte address 0x4 - core index']
  #allocation1 [shape = 'u32[144,128]{1,0:T(1,128)}', space=vmem, size = 0x12000, scoped, tag = 'internal scratch']
  #allocation2 [shape = 'f32[1,1]{1,0:T(1,128)S(6)}', space=smem, size = 0x200, scoped, tag = 'scoped memory for recommendation_forward.1']
  %s0 = inlined_call_operand.vmem [shape: bf16[32,128], index: 0, kind: input, shape index: {}]
  %s1 = inlined_call_operand.vmem [shape: bf16[64,128], index: 1, kind: input, shape index: {}]
  %s2 = inlined_call_operand.vmem [shape: bf16[128,96], index: 2, kind: input, shape index: {}]
  %s3 = inlined_call_operand.vmem [shape: f32[128,1], index: 3, kind: input, shape index: {}]
  %s4 = inlined_call_operand.vmem [shape: f32[128,1], index: 4, kind: input, shape index: {}]
  %s5 = inlined_call_operand.<no memory space> [shape: f32[1,1], index: 5, kind: input, shape index: {}]
  %s6 = inlined_call_operand.vmem [shape: f32[1,128], index: 6, kind: output, shape index: {}]
  %s7 = sld [smem:[#allocation0]]
  $region34: #{recommendation_forward.1} parent=0
    _
  %s9 = ssub.s32 1, %s7
  %s10 = scalar_select 0, %s9, %s7
  %11 = sst [smem:[#allocation2]] %s5
  // Predicated region
  $region2: #{recommendation_forward.1} parent=0 // pred_check
    _
  $region3: #{recommendation_forward.1} parent=0 // pred_check_branch
    %13 = sbr.rel (0) target = $region5
  $region4: #{recommendation_forward.1} parent=0 // pred_region
    _
  $region5: #{recommendation_forward.1} parent=0 // pred_fallthru
    _
  // Predicated region
  $region6: #{recommendation_forward.1} parent=0 // pred_check
    _
  $region7: #{recommendation_forward.1} parent=0 // pred_check_branch
    %15 = sbr.rel (0) target = $region9
  $region8: #{recommendation_forward.1} parent=0 // pred_region
    _
  $region9: #{recommendation_forward.1} parent=0 // pred_fallthru
    _
  // Predicated region
  $region10: #{recommendation_forward.1} parent=0 // pred_check
    _
  $region11: #{recommendation_forward.1} parent=0 // pred_check_branch
    %17 = sbr.rel (0) target = $region13
  $region12: #{recommendation_forward.1} parent=0 // pred_region
    _
  $region13: #{recommendation_forward.1} parent=0 // pred_fallthru
    _
  // Predicated region
  $region14: #{recommendation_forward.1} parent=0 // pred_check
    _
  $region15: #{recommendation_forward.1} parent=0 // pred_check_branch
    %19 = sbr.rel (0) target = $region17
  $region16: #{recommendation_forward.1} parent=0 // pred_region
    _
  $region17: #{recommendation_forward.1} parent=0 // pred_fallthru
    _
  // Predicated region
  $region18: #{recommendation_forward.1} parent=0 // pred_check
    _
  $region19: #{recommendation_forward.1} parent=0 // pred_check_branch
    %21 = sbr.rel (0) target = $region21
  $region20: #{recommendation_forward.1} parent=0 // pred_region
    _
  $region21: #{recommendation_forward.1} parent=0 // pred_fallthru
    _
  // Predicated region
  $region22: #{recommendation_forward.1} parent=0 // pred_check
    _
  $region23: #{recommendation_forward.1} parent=0 // pred_check_branch
    %23 = sbr.rel (0) target = $region25
  $region24: #{recommendation_forward.1} parent=0 // pred_region
    _
  $region25: #{recommendation_forward.1} parent=0 // pred_fallthru
    _
  %v25 = vld [vmem:[%s0] sm:$0xf]
  %v26 = vld [vmem:[%s0 + $0x4] sm:$0xf]
  %v27 = vld [vmem:[%s0 + $0x8] sm:$0xf]
  %v28 = vld [vmem:[%s0 + $0xc] sm:$0xf]
  %v29 = vld [vmem:[%s1] sm:$0xf]
  %v30 = vld [vmem:[%s1 + $0x4] sm:$0xf]
  %v31 = vld [vmem:[%s1 + $0x8] sm:$0xf]
  %v32 = vld [vmem:[%s1 + $0xc] sm:$0xf]
  %v33 = vld [vmem:[%s1 + $0x10] sm:$0xf]
  %v34 = vld [vmem:[%s1 + $0x14] sm:$0xf]
  %v35 = vld [vmem:[%s1 + $0x18] sm:$0xf]
  %v36 = vld [vmem:[%s1 + $0x1c] sm:$0xf]
  %v41 = vunpack.c.l.b16 %v25
  %v42 = vunpack.c.l.b16 %v26
  %v43 = vunpack.c.l.b16 %v27
  %v44 = vunpack.c.l.b16 %v28
  %v45 = vpack.c.b16 %v42, %v41
  %v46 = vpack.c.b16 %v44, %v43
  %v57 = vunpack.c.l.b16 %v29
  %v58 = vunpack.c.l.b16 %v30
  %v59 = vunpack.c.l.b16 %v31
  %v60 = vunpack.c.l.b16 %v32
  %v61 = vunpack.c.l.b16 %v33
  %v62 = vunpack.c.l.b16 %v34
  %v63 = vunpack.c.l.b16 %v35
  %v64 = vunpack.c.l.b16 %v36
  %v65 = vpack.c.b16 %v58, %v57
  %v66 = vpack.c.b16 %v60, %v59
  %v67 = vpack.c.b16 %v62, %v61
  %v68 = vpack.c.b16 %v64, %v63
  %v73 = vld [vmem:[%s2] sm:$0xf]
  %v74 = vld [vmem:[%s2 + $0x4] sm:$0xf]
  %v75 = vld [vmem:[%s2 + $0x8] sm:$0xf]
  %v76 = vld [vmem:[%s2 + $0xc] sm:$0xf]
  %v77 = vld [vmem:[%s2 + $0x10] sm:$0xf]
  %v78 = vld [vmem:[%s2 + $0x14] sm:$0xf]
  %v79 = vld [vmem:[%s2 + $0x18] sm:$0xf]
  %v80 = vld [vmem:[%s2 + $0x1c] sm:$0xf]
  %v81 = vld [vmem:[%s2 + $0x20] sm:$0xf]
  %v82 = vld [vmem:[%s2 + $0x24] sm:$0xf]
  %v83 = vld [vmem:[%s2 + $0x28] sm:$0xf]
  %v84 = vld [vmem:[%s2 + $0x2c] sm:$0xf]
  %v85 = vld [vmem:[%s2 + $0x30] sm:$0xf]
  %v86 = vld [vmem:[%s2 + $0x34] sm:$0xf]
  %v87 = vld [vmem:[%s2 + $0x38] sm:$0xf]
  %v88 = vld [vmem:[%s2 + $0x3c] sm:$0xf]
  %v89 = vld [vmem:[%s3] sm:$0xff]
  %v90 = vld [vmem:[%s3 + $0x8] sm:$0xff]
  %v91 = vld [vmem:[%s3 + $0x10] sm:$0xff]
  %v92 = vld [vmem:[%s3 + $0x18] sm:$0xff]
  %v93 = vld [vmem:[%s3 + $0x20] sm:$0xff]
  %v94 = vld [vmem:[%s3 + $0x28] sm:$0xff]
  %v95 = vld [vmem:[%s3 + $0x30] sm:$0xff]
  %v96 = vld [vmem:[%s3 + $0x38] sm:$0xff]
  %v97 = vld [vmem:[%s3 + $0x40] sm:$0xff]
  %v98 = vld [vmem:[%s3 + $0x48] sm:$0xff]
  %v99 = vld [vmem:[%s3 + $0x50] sm:$0xff]
  %v100 = vld [vmem:[%s3 + $0x58] sm:$0xff]
  %v101 = vld [vmem:[%s3 + $0x60] sm:$0xff]
  %v102 = vld [vmem:[%s3 + $0x68] sm:$0xff]
  %v103 = vld [vmem:[%s3 + $0x70] sm:$0xff]
  %v104 = vld [vmem:[%s3 + $0x78] sm:$0xff]
  %106 = vset.pattern.permute.xlu0 0
  %107 = vperm.xlu0 %106, %v89
  %v108 = vpop.permute.xlu0 %107
  %111 = vset.pattern.permute.xlu0 0
  %112 = vperm.xlu0 %111, %v90
  %v113 = vpop.permute.xlu0 %112
  %116 = vset.pattern.permute.xlu0 0
  %117 = vperm.xlu0 %116, %v91
  %v118 = vpop.permute.xlu0 %117
  %121 = vset.pattern.permute.xlu0 0
  %122 = vperm.xlu0 %121, %v92
  %v123 = vpop.permute.xlu0 %122
  %126 = vset.pattern.permute.xlu0 0
  %127 = vperm.xlu0 %126, %v93
  %v128 = vpop.permute.xlu0 %127
  %131 = vset.pattern.permute.xlu0 0
  %132 = vperm.xlu0 %131, %v94
  %v133 = vpop.permute.xlu0 %132
  %136 = vset.pattern.permute.xlu0 0
  %137 = vperm.xlu0 %136, %v95
  %v138 = vpop.permute.xlu0 %137
  %141 = vset.pattern.permute.xlu0 0
  %142 = vperm.xlu0 %141, %v96
  %v143 = vpop.permute.xlu0 %142
  %146 = vset.pattern.permute.xlu0 0
  %147 = vperm.xlu0 %146, %v97
  %v148 = vpop.permute.xlu0 %147
  %151 = vset.pattern.permute.xlu0 0
  %152 = vperm.xlu0 %151, %v98
  %v153 = vpop.permute.xlu0 %152
  %156 = vset.pattern.permute.xlu0 0
  %157 = vperm.xlu0 %156, %v99
  %v158 = vpop.permute.xlu0 %157
  %161 = vset.pattern.permute.xlu0 0
  %162 = vperm.xlu0 %161, %v100
  %v163 = vpop.permute.xlu0 %162
  %166 = vset.pattern.permute.xlu0 0
  %167 = vperm.xlu0 %166, %v101
  %v168 = vpop.permute.xlu0 %167
  %171 = vset.pattern.permute.xlu0 0
  %172 = vperm.xlu0 %171, %v102
  %v173 = vpop.permute.xlu0 %172
  %176 = vset.pattern.permute.xlu0 0
  %177 = vperm.xlu0 %176, %v103
  %v178 = vpop.permute.xlu0 %177
  %181 = vset.pattern.permute.xlu0 0
  %182 = vperm.xlu0 %181, %v104
  %v183 = vpop.permute.xlu0 %182
  %v201 = vunpack.c.l.b16 %v73
  %v202 = vunpack.c.l.b16 %v74
  %v203 = vunpack.c.l.b16 %v75
  %v204 = vunpack.c.l.b16 %v76
  %v205 = vunpack.c.l.b16 %v77
  %v206 = vunpack.c.l.b16 %v78
  %v207 = vunpack.c.l.b16 %v79
  %v208 = vunpack.c.l.b16 %v80
  %v209 = vunpack.c.l.b16 %v81
  %v210 = vunpack.c.l.b16 %v82
  %v211 = vunpack.c.l.b16 %v83
  %v212 = vunpack.c.l.b16 %v84
  %v213 = vunpack.c.l.b16 %v85
  %v214 = vunpack.c.l.b16 %v86
  %v215 = vunpack.c.l.b16 %v87
  %v216 = vunpack.c.l.b16 %v88
  %v217 = vpack.c.b16 %v202, %v201
  %v218 = vpack.c.b16 %v204, %v203
  %v219 = vpack.c.b16 %v206, %v205
  %v220 = vpack.c.b16 %v208, %v207
  %v221 = vpack.c.b16 %v210, %v209
  %v222 = vpack.c.b16 %v212, %v211
  %v223 = vpack.c.b16 %v214, %v213
  %v224 = vpack.c.b16 %v216, %v215
  %vm225 = vcmask 785408
  %v227 = vsel %vm225, %v217, 0
  %v230 = vsel %vm225, %v218, 0
  %v233 = vsel %vm225, %v219, 0
  %v236 = vsel %vm225, %v220, 0
  %v239 = vsel %vm225, %v221, 0
  %v242 = vsel %vm225, %v222, 0
  %v245 = vsel %vm225, %v223, 0
  %v248 = vsel %vm225, %v224, 0
  %250 = vmatprep.subr.bf16.mxu0 0
  %251 = vmatpush1.bf16.msra.mxu0 %v45
  %252 = vmatprep.subr.bf16.mxu0 0
  %253 = vmatpush1.bf16.msra.mxu0 %v46
  %254 = vmatprep.subr.bf16.mxu0 0
  %255 = vmatpush1.bf16.msra.mxu0 %v65
  %256 = vmatprep.subr.bf16.mxu0 0
  %257 = vmatpush1.bf16.msra.mxu0 %v66
  %258 = vmatprep.subr.bf16.mxu0 0
  %259 = vmatpush1.bf16.msra.mxu0 %v67
  %260 = vmatprep.subr.bf16.mxu0 0
  %261 = vmatpush1.bf16.msra.mxu0 %v68
  %262 = vmatprep.subr.bf16.mxu0 0
  %263 = vmatpush1.bf16.msra.mxu0 0
  %264 = vmatprep.subr.bf16.mxu0 0
  %265 = vmatpush1.bf16.msra.mxu0 0
  %266 = vmatprep.subr.bf16.mxu0 0
  %267 = vmatpush1.bf16.msra.mxu0 0
  %268 = vmatprep.subr.bf16.mxu0 0
  %269 = vmatpush1.bf16.msra.mxu0 0
  %270 = vmatprep.subr.bf16.mxu0 0
  %271 = vmatpush1.bf16.msra.mxu0 0
  %272 = vmatprep.subr.bf16.mxu0 0
  %273 = vmatpush1.bf16.msra.mxu0 0
  %274 = vmatprep.subr.bf16.mxu0 0
  %275 = vmatpush1.bf16.msra.mxu0 0
  %276 = vmatprep.subr.bf16.mxu0 0
  %277 = vmatpush1.bf16.msra.mxu0 0
  %278 = vmatprep.subr.bf16.mxu0 0
  %279 = vmatpush1.bf16.msra.mxu0 0
  %280 = vmatprep.subr.bf16.mxu0 0
  %281 = vmatpush1.bf16.msra.mxu0 0
  %282 = vmatprep.mubr.bf16.mxu0 0
  %283 = vmatmul.mubr.bf16.gmra.mrb[0].mxu0 %v227
  %v284 = vpop.f32.mrb[0].mxu0
  %v285 = vadd.f32 %v108, %v284
  %v286 = vpop.f32.mrb[0].mxu0
  %v287 = vpop.f32.mrb[0].mxu0
  %v288 = vadd.f32 %v113, %v287
  %v289 = vpop.f32.mrb[0].mxu0
  %290 = vmatprep.mubr.bf16.mxu0 0
  %291 = vmatmul.mubr.bf16.gmra.mrb[0].mxu0 %v230
  %v292 = vpop.f32.mrb[0].mxu0
  %v293 = vadd.f32 %v118, %v292
  %v294 = vpop.f32.mrb[0].mxu0
  %v295 = vpop.f32.mrb[0].mxu0
  %v296 = vadd.f32 %v123, %v295
  %v297 = vpop.f32.mrb[0].mxu0
  %298 = vmatprep.mubr.bf16.mxu0 0
  %299 = vmatmul.mubr.bf16.gmra.mrb[0].mxu0 %v233
  %v300 = vpop.f32.mrb[0].mxu0
  %v301 = vadd.f32 %v128, %v300
  %v302 = vpop.f32.mrb[0].mxu0
  %v303 = vpop.f32.mrb[0].mxu0
  %v304 = vadd.f32 %v133, %v303
  %v305 = vpop.f32.mrb[0].mxu0
  %306 = vmatprep.mubr.bf16.mxu0 0
  %307 = vmatmul.mubr.bf16.gmra.mrb[0].mxu0 %v236
  %v308 = vpop.f32.mrb[0].mxu0
  %v309 = vadd.f32 %v138, %v308
  %v310 = vpop.f32.mrb[0].mxu0
  %v311 = vpop.f32.mrb[0].mxu0
  %v312 = vadd.f32 %v143, %v311
  %v313 = vpop.f32.mrb[0].mxu0
  %314 = vmatprep.mubr.bf16.mxu0 0
  %315 = vmatmul.mubr.bf16.gmra.mrb[0].mxu0 %v239
  %v316 = vpop.f32.mrb[0].mxu0
  %v317 = vadd.f32 %v148, %v316
  %v318 = vpop.f32.mrb[0].mxu0
  %v319 = vpop.f32.mrb[0].mxu0
  %v320 = vadd.f32 %v153, %v319
  %v321 = vpop.f32.mrb[0].mxu0
  %322 = vmatprep.mubr.bf16.mxu0 0
  %323 = vmatmul.mubr.bf16.gmra.mrb[0].mxu0 %v242
  %v324 = vpop.f32.mrb[0].mxu0
  %v325 = vadd.f32 %v158, %v324
  %v326 = vpop.f32.mrb[0].mxu0
  %v327 = vpop.f32.mrb[0].mxu0
  %v328 = vadd.f32 %v163, %v327
  %v329 = vpop.f32.mrb[0].mxu0
  %330 = vmatprep.mubr.bf16.mxu0 0
  %331 = vmatmul.mubr.bf16.gmra.mrb[0].mxu0 %v245
  %v332 = vpop.f32.mrb[0].mxu0
  %v333 = vadd.f32 %v168, %v332
  %v334 = vpop.f32.mrb[0].mxu0
  %v335 = vpop.f32.mrb[0].mxu0
  %v336 = vadd.f32 %v173, %v335
  %v337 = vpop.f32.mrb[0].mxu0
  %338 = vmatprep.mubr.bf16.mxu0 0
  %339 = vmatmul.mubr.bf16.gmra.mrb[0].mxu0 %v248
  %v340 = vpop.f32.mrb[0].mxu0
  %v341 = vadd.f32 %v178, %v340
  %v342 = vpop.f32.mrb[0].mxu0
  %v343 = vpop.f32.mrb[0].mxu0
  %v344 = vadd.f32 %v183, %v343
  %v345 = vpop.f32.mrb[0].mxu0
  %346 = vdwg.mxu0
  %v347 = vmax.f32 %v285, 0.0
  %v348 = vmax.f32 %v288, 0.0
  %v349 = vmax.f32 %v293, 0.0
  %v350 = vmax.f32 %v296, 0.0
  %v351 = vmax.f32 %v301, 0.0
  %v352 = vmax.f32 %v304, 0.0
  %v353 = vmax.f32 %v309, 0.0
  %v354 = vmax.f32 %v312, 0.0
  %v355 = vmax.f32 %v317, 0.0
  %v356 = vmax.f32 %v320, 0.0
  %v357 = vmax.f32 %v325, 0.0
  %v358 = vmax.f32 %v328, 0.0
  %v359 = vmax.f32 %v333, 0.0
  %v360 = vmax.f32 %v336, 0.0
  %v361 = vmax.f32 %v341, 0.0
  %v362 = vmax.f32 %v344, 0.0
  %v363 = vld [vmem:[%s4] sm:$0xff]
  %v364 = vld [vmem:[%s4 + $0x8] sm:$0xff]
  %v365 = vld [vmem:[%s4 + $0x10] sm:$0xff]
  %v366 = vld [vmem:[%s4 + $0x18] sm:$0xff]
  %v367 = vld [vmem:[%s4 + $0x20] sm:$0xff]
  %v368 = vld [vmem:[%s4 + $0x28] sm:$0xff]
  %v369 = vld [vmem:[%s4 + $0x30] sm:$0xff]
  %v370 = vld [vmem:[%s4 + $0x38] sm:$0xff]
  %v371 = vld [vmem:[%s4 + $0x40] sm:$0xff]
  %v372 = vld [vmem:[%s4 + $0x48] sm:$0xff]
  %v373 = vld [vmem:[%s4 + $0x50] sm:$0xff]
  %v374 = vld [vmem:[%s4 + $0x58] sm:$0xff]
  %v375 = vld [vmem:[%s4 + $0x60] sm:$0xff]
  %v376 = vld [vmem:[%s4 + $0x68] sm:$0xff]
  %v377 = vld [vmem:[%s4 + $0x70] sm:$0xff]
  %v378 = vld [vmem:[%s4 + $0x78] sm:$0xff]
  %380 = vset.pattern.permute.xlu0 0
  %381 = vperm.xlu0 %380, %v363
  %v382 = vpop.permute.xlu0 %381
  %385 = vset.pattern.permute.xlu0 0
  %386 = vperm.xlu0 %385, %v364
  %v387 = vpop.permute.xlu0 %386
  %390 = vset.pattern.permute.xlu0 0
  %391 = vperm.xlu0 %390, %v365
  %v392 = vpop.permute.xlu0 %391
  %395 = vset.pattern.permute.xlu0 0
  %396 = vperm.xlu0 %395, %v366
  %v397 = vpop.permute.xlu0 %396
  %400 = vset.pattern.permute.xlu0 0
  %401 = vperm.xlu0 %400, %v367
  %v402 = vpop.permute.xlu0 %401
  %405 = vset.pattern.permute.xlu0 0
  %406 = vperm.xlu0 %405, %v368
  %v407 = vpop.permute.xlu0 %406
  %410 = vset.pattern.permute.xlu0 0
  %411 = vperm.xlu0 %410, %v369
  %v412 = vpop.permute.xlu0 %411
  %415 = vset.pattern.permute.xlu0 0
  %416 = vperm.xlu0 %415, %v370
  %v417 = vpop.permute.xlu0 %416
  %420 = vset.pattern.permute.xlu0 0
  %421 = vperm.xlu0 %420, %v371
  %v422 = vpop.permute.xlu0 %421
  %425 = vset.pattern.permute.xlu0 0
  %426 = vperm.xlu0 %425, %v372
  %v427 = vpop.permute.xlu0 %426
  %430 = vset.pattern.permute.xlu0 0
  %431 = vperm.xlu0 %430, %v373
  %v432 = vpop.permute.xlu0 %431
  %435 = vset.pattern.permute.xlu0 0
  %436 = vperm.xlu0 %435, %v374
  %v437 = vpop.permute.xlu0 %436
  %440 = vset.pattern.permute.xlu0 0
  %441 = vperm.xlu0 %440, %v375
  %v442 = vpop.permute.xlu0 %441
  %445 = vset.pattern.permute.xlu0 0
  %446 = vperm.xlu0 %445, %v376
  %v447 = vpop.permute.xlu0 %446
  %450 = vset.pattern.permute.xlu0 0
  %451 = vperm.xlu0 %450, %v377
  %v452 = vpop.permute.xlu0 %451
  %455 = vset.pattern.permute.xlu0 0
  %456 = vperm.xlu0 %455, %v378
  %v457 = vpop.permute.xlu0 %456
  %v459 = vmul.f32 %v347, %v382
  %v460 = vmul.f32 %v348, %v387
  %v461 = vmul.f32 %v349, %v392
  %v462 = vmul.f32 %v350, %v397
  %v463 = vmul.f32 %v351, %v402
  %v464 = vmul.f32 %v352, %v407
  %v465 = vmul.f32 %v353, %v412
  %v466 = vmul.f32 %v354, %v417
  %v467 = vmul.f32 %v355, %v422
  %v468 = vmul.f32 %v356, %v427
  %v469 = vmul.f32 %v357, %v432
  %v470 = vmul.f32 %v358, %v437
  %v471 = vmul.f32 %v359, %v442
  %v472 = vmul.f32 %v360, %v447
  %v473 = vmul.f32 %v361, %v452
  %v474 = vmul.f32 %v362, %v457
  %v475 = vadd.f32 %v459, %v460
  %v476 = vadd.f32 %v475, %v461
  %v477 = vadd.f32 %v476, %v462
  %v478 = vadd.f32 %v477, %v463
  %v479 = vadd.f32 %v478, %v464
  %v480 = vadd.f32 %v479, %v465
  %v481 = vadd.f32 %v480, %v466
  %v482 = vadd.f32 %v481, %v467
  %v483 = vadd.f32 %v482, %v468
  %v484 = vadd.f32 %v483, %v469
  %v485 = vadd.f32 %v484, %v470
  %v486 = vadd.f32 %v485, %v471
  %v487 = vadd.f32 %v486, %v472
  %v488 = vadd.f32 %v487, %v473
  %v489 = vadd.f32 %v488, %v474
  %v490 = vrot.slane %v489, 4
  %v491 = vadd.f32 %v489, %v490
  %v492 = vrot.slane %v491, 2
  %v493 = vadd.f32 %v491, %v492
  %v494 = vrot.slane %v493, 1
  %v495 = vadd.f32 %v493, %v494
  %s496 = sld [smem:[#allocation2]]
  %v497 = vstv %s496
  %v498 = vadd.f32 %v495, %v497
  %499 = vst [vmem:[%s6] sm:$0x1] %v498
  // Predicated region
  $region26: #{recommendation_forward.1} parent=0 // pred_check
    _
  $region27: #{recommendation_forward.1} parent=0 // pred_check_branch
    %501 = sbr.rel (0) target = $region29
  $region28: #{recommendation_forward.1} parent=0 // pred_region
    _
  $region29: #{recommendation_forward.1} parent=0 // pred_fallthru
    _
  // Predicated region
  $region30: #{recommendation_forward.1} parent=0 // pred_check
    _
  $region31: #{recommendation_forward.1} parent=0 // pred_check_branch
    %503 = sbr.rel (0) target = $region33
  $region32: #{recommendation_forward.1} parent=0 // pred_region
    _
  $region33: #{recommendation_forward.1} parent=0 // pred_fallthru
    _

</llo_original>
